<compile_context>
chip_gen: v6e
topology: v6e:2x2x1
jax: 0.10.0
libtpu: 0.0.40
codegen_flags: <defaults>
</compile_context>

<pallas_src>
import functools
import math

import jax
import jax.numpy as jnp
from jax.experimental import pallas as pl
from jax.experimental.pallas import tpu as pltpu


def _round_up(a, m):
    return ((a + m - 1) // m) * m


def _gating_kernel(x_ref, w_ref, b_ref, out_ref, *, top_k, approx_recip):
    # x_ref: (TILE_N, D)   w_ref: (D, E)   b_ref: (1, E)
    # out_ref: (TILE_N, 2*top_k) int32  ->  [w_0..w_{k-1} bitcast, idx_0..idx_{k-1}]
    x = x_ref[...]
    w = w_ref[...]
    b = b_ref[...].astype(jnp.float32)

    # Linear: logits = x @ W^T + b (W stored pre-transposed as (D, E)),
    # f32 accumulation on the MXU regardless of input dtype.
    logits = jnp.dot(x, w, preferred_element_type=jnp.float32) + b

    # Numerically stable softmax numerator.  Softmax is monotonic, so top-k on
    # the unnormalized numerator yields identical indices; only the k selected
    # values get normalized with one (N,1) EUP reciprocal (no full (N,E) divide).
    m = jnp.max(logits, axis=-1, keepdims=True)
    enum = jnp.exp(logits - m)                                   # logits dead here
    inv_denom = pl.reciprocal(jnp.sum(enum, axis=-1, keepdims=True),
                              approx=approx_recip)

    rows, num_experts = enum.shape
    e_iota = jax.lax.broadcasted_iota(jnp.int32, enum.shape, 1)          # hoisted
    out_iota = jax.lax.broadcasted_iota(jnp.int32, (rows, 2 * top_k), 1)

    # Iterative top-k: k rounds of (max, first-index-of-max, mask-out).  The
    # results are packed into a single int32 slab and written with ONE store
    # per tile (no width-1 masked column stores, single writeback DMA).
    work = enum
    slab = jnp.zeros((rows, 2 * top_k), jnp.int32)
    for k in range(top_k):
        mv = jnp.max(work, axis=-1, keepdims=True)               # (TILE_N, 1)
        idx = jnp.min(jnp.where(work == mv, e_iota, num_experts),
                      axis=-1, keepdims=True)                    # first occurrence
        wbits = pltpu.bitcast(mv * inv_denom, jnp.int32)
        slab = jnp.where(out_iota == k, wbits, slab)
        slab = jnp.where(out_iota == top_k + k, idx, slab)
        if k + 1 < top_k:
            work = jnp.where(e_iota == idx, -jnp.inf, work)

    out_ref[...] = slab


def gating_network(x, w_t, b, *, top_k=2, x_tile_target_bytes=4 << 20,
                   vmem_budget_bytes=None, compute_dtype=None,
                   approx_recip=True):
    """MoE router forward.

    x: (..., input_dim); w_t: (input_dim, num_experts) (pre-transposed Linear
    weight); b: (num_experts,).  Returns (topk_weights f32, topk_indices i32),
    both shaped (..., top_k).
    """
    orig_shape = x.shape
    input_dim = orig_shape[-1]
    num_experts = w_t.shape[-1]
    if not (1 <= top_k <= num_experts):
        raise ValueError(f"top_k={top_k} must be in [1, num_experts={num_experts}]")
    n = math.prod(orig_shape[:-1])

    x2 = x.reshape(n, input_dim)                 # keep native dtype (no f32 upcast)
    if compute_dtype is not None:                # optional bf16 path (v5e bandwidth)
        x2 = x2.astype(compute_dtype)
    w2 = w_t.astype(x2.dtype)
    b2 = b.reshape(1, num_experts).astype(jnp.float32)

    elt = jnp.dtype(x2.dtype).itemsize
    sublane = {4: 8, 2: 16, 1: 32}.get(elt, 8)
    out_w = 2 * top_k

    # Generation-aware VMEM capacity (128 MiB v5e/v6e, 64 MiB per-TC v7x).
    try:
        vmem_cap = int(pltpu.get_tpu_info().vmem_capacity_bytes)
    except Exception:
        vmem_cap = 64 << 20                      # conservative (v7x) fallback
    if vmem_budget_bytes is None:
        vmem_budget_bytes = max(24 << 20, int(vmem_cap * 0.55))

    # Double-buffered x tile + resident gate weight/bias + double-buffered output slab.
    def _tile_bytes(t):
        return (2 * t * input_dim * elt
                + 2 * input_dim * num_experts * elt
                + 2 * num_experts * 4
                + 2 * t * out_w * 4)

    # Row-tile sized from input_dim: ~x_tile_target_bytes per x buffer, whole N
    # when it fits, and >=2 grid steps so megacore chips can split the axis.
    tile_n = _round_up(max(x_tile_target_bytes // max(input_dim * elt, 1), 1), sublane)
    tile_n = min(tile_n, _round_up(n, sublane))
    half_n = _round_up(-(-n // 2), sublane)
    tile_n = max(min(tile_n, half_n), sublane)
    while tile_n > sublane and _tile_bytes(tile_n) > vmem_budget_bytes:
        tile_n = _round_up(max(tile_n // 2, sublane), sublane)

    grid = (pl.cdiv(n, tile_n),)                 # partial last block: no pad copy of x
    vmem_limit = int(min(max(vmem_cap - (8 << 20), 32 << 20),
                         max(32 << 20, _tile_bytes(tile_n) + (8 << 20))))

    kernel = functools.partial(_gating_kernel, top_k=top_k,
                               approx_recip=approx_recip)

    cost = pl.CostEstimate(
        flops=2 * n * input_dim * num_experts,
        transcendentals=n * num_experts,
        bytes_accessed=(n * input_dim * elt
                        + input_dim * num_experts * elt
                        + num_experts * 4
                        + n * out_w * 4),
    )

    slab = pl.pallas_call(
        kernel,
        out_shape=jax.ShapeDtypeStruct((n, out_w), jnp.int32),
        grid=grid,
        in_specs=[
            pl.BlockSpec((tile_n, input_dim), lambda i: (i, 0)),
            pl.BlockSpec((input_dim, num_experts), lambda i: (0, 0)),  # resident
            pl.BlockSpec((1, num_experts), lambda i: (0, 0)),          # resident
        ],
        out_specs=pl.BlockSpec((tile_n, out_w), lambda i: (i, 0)),
        compiler_params=pltpu.CompilerParams(
            dimension_semantics=("parallel",),    # megacore splits the N grid
            vmem_limit_bytes=vmem_limit,
        ),
        cost_estimate=cost,
    )(x2, w2, b2)

    out_shape = orig_shape[:-1] + (top_k,)
    topk_w = jax.lax.bitcast_convert_type(slab[:, :top_k], jnp.float32)
    topk_i = slab[:, top_k:]
    return topk_w.reshape(out_shape), topk_i.reshape(out_shape)


if __name__ == "__main__":
    # Small shapes consistent with the module: batch=2, seq=8, hidden=32, 8 experts.
    batch, seq, input_dim, num_experts, top_k = 2, 8, 32, 8, 2

    key = jax.random.PRNGKey(0)
    kx, kw, kb = jax.random.split(key, 3)

    x = jax.random.normal(kx, (batch, seq, input_dim), dtype=jnp.float32)
    # Deterministic "Linear" params (stored transposed: (input_dim, num_experts)).
    w_t = jax.random.normal(kw, (input_dim, num_experts), dtype=jnp.float32) * 0.05
    b = jax.random.normal(kb, (num_experts,), dtype=jnp.float32) * 0.05

    topk_w, topk_i = gating_network(x, w_t, b, top_k=top_k)
    jax.block_until_ready((topk_w, topk_i))

    # Reference check in plain JAX.
    logits_ref = x @ w_t + b
    probs_ref = jax.nn.softmax(logits_ref, axis=-1)
    ref_w, ref_i = jax.lax.top_k(probs_ref, top_k)
    assert topk_w.shape == (batch, seq, top_k)
    assert topk_i.shape == (batch, seq, top_k)
    # approx=True reciprocal on the softmax denominator -> slightly relaxed tol.
    assert jnp.allclose(topk_w, ref_w, atol=2e-3), "top-k weights mismatch"
    assert jnp.array_equal(topk_i, ref_i.astype(jnp.int32)), "top-k indices mismatch"

    print("KERNEL_OK")
</pallas_src>

<mosaic_0001>
module attributes {stable_mosaic.version = 11 : i64} {
  func.func @_gating_kernel(%arg0: i32, %arg1: memref<8x32xf32, #tpu.memory_space<vmem>>, %arg2: memref<32x8xf32, #tpu.memory_space<vmem>>, %arg3: memref<1x8xf32, #tpu.memory_space<vmem>>, %arg4: memref<8x4xi32, #tpu.memory_space<vmem>>) attributes {dimension_semantics = [#tpu.dimension_semantics<parallel>], iteration_bounds = array<i64: 2>, scalar_prefetch = 0 : i64, scratch_operands = 0 : i64, tpu.core_type = #tpu.core_type<tc>, window_params = [{transform_indices = @transform_0, window_bounds = array<i64: 8, 32>}, {pipeline_mode = #tpu.pipeline_mode<synchronous>, transform_indices = @transform_1, window_bounds = array<i64: 32, 8>}, {pipeline_mode = #tpu.pipeline_mode<synchronous>, transform_indices = @transform_2, window_bounds = array<i64: 1, 8>}, {transform_indices = @transform_3, window_bounds = array<i64: 8, 4>}]} {
    %c0 = arith.constant 0 : index
    %c0_0 = arith.constant 0 : index
    %0 = vector.load %arg1[%c0, %c0_0] : memref<8x32xf32, #tpu.memory_space<vmem>>, vector<8x32xf32>
    %c0_1 = arith.constant 0 : index
    %c0_2 = arith.constant 0 : index
    %1 = vector.load %arg2[%c0_1, %c0_2] : memref<32x8xf32, #tpu.memory_space<vmem>>, vector<32x8xf32>
    %c0_3 = arith.constant 0 : index
    %c0_4 = arith.constant 0 : index
    %2 = vector.load %arg3[%c0_3, %c0_4] : memref<1x8xf32, #tpu.memory_space<vmem>>, vector<1x8xf32>
    %cst = arith.constant dense<0.000000e+00> : vector<8x8xf32>
    %3 = tpu.matmul %0, %1, %cst {dimension_numbers = #tpu.dot_dimension_numbers<[1], [0], [0], [1], [0, 0, 1, 1], [], []>} : vector<8x32xf32>, vector<32x8xf32>, vector<8x8xf32> -> vector<8x8xf32>
    %4 = vector.broadcast %2 : vector<1x8xf32> to vector<8x8xf32>
    %5 = arith.addf %3, %4 : vector<8x8xf32>
    %cst_5 = arith.constant dense<0xFF800000> : vector<8xf32>
    %6 = vector.multi_reduction <maximumf>, %5, %cst_5 [1] : vector<8x8xf32> to vector<8xf32>
    %7 = vector.shape_cast %6 : vector<8xf32> to vector<8x1xf32>
    %8 = vector.broadcast %7 : vector<8x1xf32> to vector<8x8xf32>
    %9 = arith.subf %5, %8 : vector<8x8xf32>
    %10 = math.exp %9 : vector<8x8xf32>
    %cst_6 = arith.constant dense<0.000000e+00> : vector<8xf32>
    %11 = vector.multi_reduction <add>, %10, %cst_6 [1] : vector<8x8xf32> to vector<8xf32>
    %12 = vector.shape_cast %11 : vector<8xf32> to vector<8x1xf32>
    %13 = tpu.reciprocal %12 {approx = true} : vector<8x1xf32> -> vector<8x1xf32>
    %14 = tpu.iota {dimensions = array<i32: 1>} : vector<8x8xi32>
    %15 = tpu.iota {dimensions = array<i32: 1>} : vector<8x4xi32>
    %c0_i32 = arith.constant 0 : i32
    %16 = vector.broadcast %c0_i32 : i32 to vector<8x4xi32>
    %cst_7 = arith.constant dense<0xFF800000> : vector<8xf32>
    %17 = vector.multi_reduction <maximumf>, %10, %cst_7 [1] : vector<8x8xf32> to vector<8xf32>
    %18 = vector.shape_cast %17 : vector<8xf32> to vector<8x1xf32>
    %19 = vector.broadcast %18 : vector<8x1xf32> to vector<8x8xf32>
    %20 = arith.cmpf oeq, %10, %19 : vector<8x8xf32>
    %c8_i32 = arith.constant 8 : i32
    %21 = vector.broadcast %c8_i32 : i32 to vector<8x8xi32>
    %22 = arith.select %20, %14, %21 : vector<8x8xi1>, vector<8x8xi32>
    %cst_8 = arith.constant dense<2147483647> : vector<8xi32>
    %23 = vector.multi_reduction <minsi>, %22, %cst_8 [1] : vector<8x8xi32> to vector<8xi32>
    %24 = vector.shape_cast %23 : vector<8xi32> to vector<8x1xi32>
    %25 = arith.mulf %18, %13 : vector<8x1xf32>
    %26 = tpu.bitcast %25 : vector<8x1xf32> -> vector<8x1xi32>
    %c0_i32_9 = arith.constant 0 : i32
    %27 = vector.broadcast %c0_i32_9 : i32 to vector<8x4xi32>
    %28 = arith.cmpi eq, %15, %27 : vector<8x4xi32>
    %29 = vector.shape_cast %26 : vector<8x1xi32> to vector<8x1xi32>
    %30 = vector.broadcast %29 : vector<8x1xi32> to vector<8x4xi32>
    %31 = arith.select %28, %30, %16 : vector<8x4xi1>, vector<8x4xi32>
    %c2_i32 = arith.constant 2 : i32
    %32 = vector.broadcast %c2_i32 : i32 to vector<8x4xi32>
    %33 = arith.cmpi eq, %15, %32 : vector<8x4xi32>
    %34 = vector.shape_cast %24 : vector<8x1xi32> to vector<8x1xi32>
    %35 = vector.broadcast %34 : vector<8x1xi32> to vector<8x4xi32>
    %36 = arith.select %33, %35, %31 : vector<8x4xi1>, vector<8x4xi32>
    %37 = vector.broadcast %24 : vector<8x1xi32> to vector<8x8xi32>
    %38 = arith.cmpi eq, %14, %37 : vector<8x8xi32>
    %cst_10 = arith.constant 0xFF800000 : f32
    %39 = vector.broadcast %cst_10 : f32 to vector<8x8xf32>
    %40 = arith.select %38, %39, %10 : vector<8x8xi1>, vector<8x8xf32>
    %cst_11 = arith.constant dense<0xFF800000> : vector<8xf32>
    %41 = vector.multi_reduction <maximumf>, %40, %cst_11 [1] : vector<8x8xf32> to vector<8xf32>
    %42 = vector.shape_cast %41 : vector<8xf32> to vector<8x1xf32>
    %43 = vector.broadcast %42 : vector<8x1xf32> to vector<8x8xf32>
    %44 = arith.cmpf oeq, %40, %43 : vector<8x8xf32>
    %c8_i32_12 = arith.constant 8 : i32
    %45 = vector.broadcast %c8_i32_12 : i32 to vector<8x8xi32>
    %46 = arith.select %44, %14, %45 : vector<8x8xi1>, vector<8x8xi32>
    %cst_13 = arith.constant dense<2147483647> : vector<8xi32>
    %47 = vector.multi_reduction <minsi>, %46, %cst_13 [1] : vector<8x8xi32> to vector<8xi32>
    %48 = vector.shape_cast %47 : vector<8xi32> to vector<8x1xi32>
    %49 = arith.mulf %42, %13 : vector<8x1xf32>
    %50 = tpu.bitcast %49 : vector<8x1xf32> -> vector<8x1xi32>
    %c1_i32 = arith.constant 1 : i32
    %51 = vector.broadcast %c1_i32 : i32 to vector<8x4xi32>
    %52 = arith.cmpi eq, %15, %51 : vector<8x4xi32>
    %53 = vector.shape_cast %50 : vector<8x1xi32> to vector<8x1xi32>
    %54 = vector.broadcast %53 : vector<8x1xi32> to vector<8x4xi32>
    %55 = arith.select %52, %54, %36 : vector<8x4xi1>, vector<8x4xi32>
    %c3_i32 = arith.constant 3 : i32
    %56 = vector.broadcast %c3_i32 : i32 to vector<8x4xi32>
    %57 = arith.cmpi eq, %15, %56 : vector<8x4xi32>
    %58 = vector.shape_cast %48 : vector<8x1xi32> to vector<8x1xi32>
    %59 = vector.broadcast %58 : vector<8x1xi32> to vector<8x4xi32>
    %60 = arith.select %57, %59, %55 : vector<8x4xi1>, vector<8x4xi32>
    %c0_14 = arith.constant 0 : index
    %c0_15 = arith.constant 0 : index
    %61 = vector.load %arg4[%c0_14, %c0_15] : memref<8x4xi32, #tpu.memory_space<vmem>>, vector<8x4xi32>
    tpu.vector_store %arg4[%c0_14, %c0_15], %60 {strides = array<i32>} : memref<8x4xi32, #tpu.memory_space<vmem>>, vector<8x4xi32>,
    return
  }
  func.func @transform_0(%arg0: i32) -> (i32, i32) {
    %c0_i32 = arith.constant 0 : i32
    %c0_i32_0 = arith.constant 0 : i32
    return %arg0, %c0_i32 : i32, i32
  }
  func.func @transform_1(%arg0: i32) -> (i32, i32) {
    %c0_i32 = arith.constant 0 : i32
    %c0_i32_0 = arith.constant 0 : i32
    %c0_i32_1 = arith.constant 0 : i32
    return %c0_i32, %c0_i32_0 : i32, i32
  }
  func.func @transform_2(%arg0: i32) -> (i32, i32) {
    %c0_i32 = arith.constant 0 : i32
    %c0_i32_0 = arith.constant 0 : i32
    %c0_i32_1 = arith.constant 0 : i32
    return %c0_i32, %c0_i32_0 : i32, i32
  }
  func.func @transform_3(%arg0: i32) -> (i32, i32) {
    %c0_i32 = arith.constant 0 : i32
    %c0_i32_0 = arith.constant 0 : i32
    return %arg0, %c0_i32 : i32, i32
  }
}

</mosaic_0001>

<llo_original>
// kernel: tpu_custom_call.1
$region0: #{tpu_custom_call.1}
  #allocation0 [shape = 'u32[]', space=smem, size = 0x4, offset = 0x4, fixed_abs, tag = 'smem constant byte address 0x4 - core index']
  #allocation1 [shape = 'u32[144,128]{1,0:T(1,128)}', space=vmem, size = 0x12000, scoped, tag = 'internal scratch']
  %s0 = inlined_call_operand.vmem [shape: f32[16,32], index: 0, kind: input, shape index: {}]
  %s1 = inlined_call_operand.vmem [shape: f32[32,8], index: 1, kind: input, shape index: {}]
  %s2 = inlined_call_operand.vmem [shape: f32[1,8], index: 2, kind: input, shape index: {}]
  %s3 = inlined_call_operand.vmem [shape: s32[16,4], index: 3, kind: output, shape index: {}]
  %s4 = sld [smem:[#allocation0]]
  $region45: #{tpu_custom_call.1} parent=0
    _
  %s6 = ssub.s32 1, %s4
  %s7 = scalar_select 0, %s6, %s4
  loop: start=0, step=1, limit=4
  $region2: #{tpu_custom_call.1} parent=0 // loop_pre_header
    _
  $region3: #{tpu_custom_call.1} parent=0 // loop_header
    %s9 = sphi 0, %s13
    %p10 = scmp.ge.s32.totalorder %s9, 4
    %s19 = sphi 0, %s21
    %s22 = sphi 0, %s19
    %s23 = sphi 0, %s22
    %s39 = sphi 0, %s23
    %s43 = sphi 0, %s43
    %s45 = sphi 0, %s43
    %s46 = sphi 0, %s45
    %s60 = sphi 0, %s46
    %s64 = sphi 0, %s64
    %s66 = sphi 0, %s64
    %s67 = sphi 0, %s66
    %s81 = sphi 0, %s67
    %s87 = sphi 0, %s89
    %s90 = sphi 0, %s87
    %s91 = sphi 0, %s90
    %s107 = sphi 0, %s91
  $region4: #{tpu_custom_call.1} parent=0 // loop_header_branch
    %12 = sbr.rel (%p10) target = $region8
  $region5: #{tpu_custom_call.1} parent=0 // loop_body
    %s14 = ssub.s32 %s9, 1
    %s15 = ssub.s32 %s9, 2
    %s16 = sadd.s32 %s9, 1
    %s17 = ssub.s32 %s9, %s16
    %p18 = scmp.eq.s32.totalorder %s17, 0
    %s20 = sadd.s32 %s19, 1
    %s21 = scalar_select %p18, %s19, %s20
    %p24 = pneg %p18
    %p25 = scmp.eq.s32.totalorder %s9, 1
    %p26 = por %p24, %p25
    %p27 = scmp.ne.s32.totalorder %s19, %s22
    %p28 = scmp.eq.s32.totalorder %s9, 0
    %p29 = por %p27, %p28
    %p30 = scmp.ne.s32.totalorder %s19, %s22
    %p31 = scmp.eq.s32.totalorder %s14, 1
    %p32 = por %p30, %p31
    %p33 = scmp.ne.s32.totalorder %s22, %s23
    %p34 = scmp.eq.s32.totalorder %s14, 0
    %p35 = por %p33, %p34
    %p36 = scmp.ne.s32.totalorder %s22, %s23
    %p37 = scmp.eq.s32.totalorder %s15, 1
    %p38 = por %p36, %p37
    %p40 = scmp.ne.s32.totalorder %s23, %s39
    %p41 = scmp.eq.s32.totalorder %s15, 0
    %p42 = por %p40, %p41
    %s44 = sadd.s32 %s43, 1
    %p47 = scmp.eq.s32.totalorder %s9, 1
    %p48 = scmp.ne.s32.totalorder %s43, %s45
    %p49 = scmp.eq.s32.totalorder %s9, 0
    %p50 = por %p48, %p49
    %p51 = scmp.ne.s32.totalorder %s43, %s45
    %p52 = scmp.eq.s32.totalorder %s14, 1
    %p53 = por %p51, %p52
    %p54 = scmp.ne.s32.totalorder %s45, %s46
    %p55 = scmp.eq.s32.totalorder %s14, 0
    %p56 = por %p54, %p55
    %p57 = scmp.ne.s32.totalorder %s45, %s46
    %p58 = scmp.eq.s32.totalorder %s15, 1
    %p59 = por %p57, %p58
    %p61 = scmp.ne.s32.totalorder %s46, %s60
    %p62 = scmp.eq.s32.totalorder %s15, 0
    %p63 = por %p61, %p62
    %s65 = sadd.s32 %s64, 1
    %p68 = scmp.eq.s32.totalorder %s9, 1
    %p69 = scmp.ne.s32.totalorder %s64, %s66
    %p70 = scmp.eq.s32.totalorder %s9, 0
    %p71 = por %p69, %p70
    %p72 = scmp.ne.s32.totalorder %s64, %s66
    %p73 = scmp.eq.s32.totalorder %s14, 1
    %p74 = por %p72, %p73
    %p75 = scmp.ne.s32.totalorder %s66, %s67
    %p76 = scmp.eq.s32.totalorder %s14, 0
    %p77 = por %p75, %p76
    %p78 = scmp.ne.s32.totalorder %s66, %s67
    %p79 = scmp.eq.s32.totalorder %s15, 1
    %p80 = por %p78, %p79
    %p82 = scmp.ne.s32.totalorder %s67, %s81
    %p83 = scmp.eq.s32.totalorder %s15, 0
    %p84 = por %p82, %p83
    %s85 = ssub.s32 %s9, %s16
    %p86 = scmp.eq.s32.totalorder %s85, 0
    %s88 = sadd.s32 %s87, 1
    %s89 = scalar_select %p86, %s87, %s88
    %p92 = pneg %p86
    %p93 = scmp.eq.s32.totalorder %s9, 1
    %p94 = por %p92, %p93
    %p95 = scmp.ne.s32.totalorder %s87, %s90
    %p96 = scmp.eq.s32.totalorder %s9, 0
    %p97 = por %p95, %p96
    %p98 = scmp.ne.s32.totalorder %s87, %s90
    %p99 = scmp.eq.s32.totalorder %s14, 1
    %p100 = por %p98, %p99
    %p101 = scmp.ne.s32.totalorder %s90, %s91
    %p102 = scmp.eq.s32.totalorder %s14, 0
    %p103 = por %p101, %p102
    %p104 = scmp.ne.s32.totalorder %s90, %s91
    %p105 = scmp.eq.s32.totalorder %s15, 1
    %p106 = por %p104, %p105
    %p108 = scmp.ne.s32.totalorder %s91, %s107
    %p109 = scmp.eq.s32.totalorder %s15, 0
    %p110 = por %p108, %p109
    %p111 = scmp.le.s32.totalorder 1, %s9
    %p112 = scmp.lt.s32.totalorder %s9, 3
    %p113 = pnand %p111, %p112
    %p114 = pneg %p113
    // Predicated region
    $region9: #{tpu_custom_call.1} parent=5 // pred_check
      _
    $region10: #{tpu_custom_call.1} parent=5 // pred_check_branch
      %116 = sbr.rel (%p113) target = $region12
    $region11: #{tpu_custom_call.1} parent=5 // pred_region
      %s117 = ssub.s32 %s9, 1
      // Predicated region
      $region13: #{tpu_custom_call.1} parent=11 // pred_check
        %p118 = pneg %p56
      $region14: #{tpu_custom_call.1} parent=11 // pred_check_branch
        %120 = sbr.rel (%p118) target = $region16
      $region15: #{tpu_custom_call.1} parent=11 // pred_region
        _
      $region16: #{tpu_custom_call.1} parent=11 // pred_fallthru
        _
      // Predicated region
      $region17: #{tpu_custom_call.1} parent=11 // pred_check
        %p121 = pneg %p77
      $region18: #{tpu_custom_call.1} parent=11 // pred_check_branch
        %123 = sbr.rel (%p121) target = $region20
      $region19: #{tpu_custom_call.1} parent=11 // pred_region
        _
      $region20: #{tpu_custom_call.1} parent=11 // pred_fallthru
        _
    $region12: #{tpu_custom_call.1} parent=5 // pred_fallthru
      _
    %p124 = scmp.lt.s32.totalorder %s9, 2
    // Predicated region
    $region21: #{tpu_custom_call.1} parent=5 // pred_check
      %p125 = pneg %p124
    $region22: #{tpu_custom_call.1} parent=5 // pred_check_branch
      %127 = sbr.rel (%p125) target = $region24
    $region23: #{tpu_custom_call.1} parent=5 // pred_region
      // Predicated region
      $region25: #{tpu_custom_call.1} parent=23 // pred_check
        %p128 = pneg %p29
      $region26: #{tpu_custom_call.1} parent=23 // pred_check_branch
        %130 = sbr.rel (%p128) target = $region28
      $region27: #{tpu_custom_call.1} parent=23 // pred_region
        %p131 = scmp.lt.s32.totalorder %s9, 1
        %s132 = scalar_select %p131, %s9, 1
        %s133 = smul.addr %s132, 8
        %s134 = scalar_lea.vmem %s0, %s133
      $region28: #{tpu_custom_call.1} parent=23 // pred_fallthru
        _
    $region24: #{tpu_custom_call.1} parent=5 // pred_fallthru
      _
    %p135 = scmp.le.s32.totalorder 1, %s9
    %p136 = scmp.lt.s32.totalorder %s9, 3
    %p137 = pnand %p135, %p136
    %p138 = pneg %p137
    // Predicated region
    $region29: #{tpu_custom_call.1} parent=5 // pred_check
      _
    $region30: #{tpu_custom_call.1} parent=5 // pred_check_branch
      %140 = sbr.rel (%p137) target = $region32
    $region31: #{tpu_custom_call.1} parent=5 // pred_region
      %s141 = ssub.s32 %s9, 1
      %p142 = scmp.lt.s32.totalorder %s14, 1
      %s143 = scalar_select %p142, %s14, 1
      %s144 = smul.addr %s143, 8
      %s145 = scalar_lea.vmem %s0, %s144
      %p146 = pneg %p35
      %p147 = pneg %p32
      %p148 = pneg %p56
      %p149 = pneg %p53
      %p150 = pneg %p77
      %p151 = pneg %p74
      %p152 = pneg %p103
      %p153 = pneg %p100
      %p154 = scmp.lt.s32.totalorder %s14, 1
      %s155 = scalar_select %p154, %s14, 1
      %s156 = smul.addr %s155, 8
      %s157 = scalar_lea.vmem %s3, %s156
      %p158 = scmp.lt.s32.totalorder %s14, 1
      %s159 = scalar_select %p158, %s14, 1
      %s160 = smul.addr %s159, 8
      %s161 = scalar_lea.vmem %s0, %s160
      %p162 = scmp.lt.s32.totalorder %s14, 1
      %s163 = scalar_select %p162, %s14, 1
      %s164 = smul.addr %s163, 8
      %s165 = scalar_lea.vmem %s3, %s164
      %v166 = vld [vmem:[%s161] sm:$0xff]
      %v167 = vld [vmem:[%s1] sm:$0xff]
      %v168 = vld [vmem:[%s1 + $0x8] sm:$0xff]
      %v169 = vld [vmem:[%s1 + $0x10] sm:$0xff]
      %v170 = vld [vmem:[%s1 + $0x18] sm:$0xff]
      %v171 = vld [vmem:[%s2] sm:$0x1]
      %v173 = vlaneseq
      %v174 = vshrl.u32 %v173, 7
      %v175 = vsub.s32 0, %v174
      %v176 = vrot.slane %v171, %v175
      %vm178 = vcmask 261120
      %v180 = vsel %vm178, %v166, 0
      %182 = vmatprep.subr.mxu0 0.0
      %183 = vmatpush1.msra.mxu0 0.0
      %184 = vmatprep.subr.mxu0 0.0
      %185 = vmatpush1.msra.mxu0 0.0
      %186 = vmatprep.subr.mxu0 0.0
      %187 = vmatpush1.msra.mxu0 0.0
      %188 = vmatprep.subr.mxu0 0.0
      %189 = vmatpush1.msra.mxu0 0.0
      %190 = vmatprep.subr.mxu0 0.0
      %191 = vmatpush1.msra.mxu0 0.0
      %192 = vmatprep.subr.mxu0 0.0
      %193 = vmatpush1.msra.mxu0 0.0
      %194 = vmatprep.subr.mxu0 0.0
      %195 = vmatpush1.msra.mxu0 0.0
      %196 = vmatprep.subr.mxu0 0.0
      %197 = vmatpush1.msra.mxu0 0.0
      %198 = vmatprep.subr.mxu0 0.0
      %199 = vmatpush1.msra.mxu0 0.0
      %200 = vmatprep.subr.mxu0 0.0
      %201 = vmatpush1.msra.mxu0 0.0
      %202 = vmatprep.subr.mxu0 0.0
      %203 = vmatpush1.msra.mxu0 0.0
      %204 = vmatprep.subr.mxu0 0.0
      %205 = vmatpush1.msra.mxu0 0.0
      %206 = vmatprep.subr.mxu0 0.0
      %207 = vmatpush1.msra.mxu0 %v170
      %208 = vmatprep.subr.mxu0 0.0
      %209 = vmatpush1.msra.mxu0 %v169
      %210 = vmatprep.subr.mxu0 0.0
      %211 = vmatpush1.msra.mxu0 %v168
      %212 = vmatprep.subr.mxu0 0.0
      %213 = vmatpush1.msra.mxu0 %v167
      %214 = vmatprep.subr.mxu0 0.0
      %215 = vmatpush2.msra.mxu0 0.0
      %216 = vmatprep.subr.mxu0 0.0
      %217 = vmatpush2.msra.mxu0 0.0
      %218 = vmatprep.subr.mxu0 0.0
      %219 = vmatpush2.msra.mxu0 0.0
      %220 = vmatprep.subr.mxu0 0.0
      %221 = vmatpush2.msra.mxu0 0.0
      %222 = vmatprep.subr.mxu0 0.0
      %223 = vmatpush2.msra.mxu0 0.0
      %224 = vmatprep.subr.mxu0 0.0
      %225 = vmatpush2.msra.mxu0 0.0
      %226 = vmatprep.subr.mxu0 0.0
      %227 = vmatpush2.msra.mxu0 0.0
      %228 = vmatprep.subr.mxu0 0.0
      %229 = vmatpush2.msra.mxu0 0.0
      %230 = vmatprep.subr.mxu0 0.0
      %231 = vmatpush2.msra.mxu0 0.0
      %232 = vmatprep.subr.mxu0 0.0
      %233 = vmatpush2.msra.mxu0 0.0
      %234 = vmatprep.subr.mxu0 0.0
      %235 = vmatpush2.msra.mxu0 0.0
      %236 = vmatprep.subr.mxu0 0.0
      %237 = vmatpush2.msra.mxu0 0.0
      %238 = vmatprep.subr.mxu0 0.0
      %239 = vmatpush2.msra.mxu0 0.0
      %240 = vmatprep.subr.mxu0 0.0
      %241 = vmatpush2.msra.mxu0 0.0
      %242 = vmatprep.subr.mxu0 0.0
      %243 = vmatpush2.msra.mxu0 0.0
      %244 = vmatprep.subr.mxu0 0.0
      %245 = vmatpush2.msra.mxu0 0.0
      %246 = vmatprep.mubr.f32.mxu0 0.0
      %247 = vmatmul.mubr.f32.gmra.mxu0 %v180
      %v248 = vpop.f32.mrf.mxu0
      %v249 = vadd.f32 %v176, %v248
      %v250 = vpop.f32.mrf.mxu0
      %251 = vdwg.mxu0
      %vm252 = vcmask 64512
      %v253 = vsel %vm252, %v249, -inf
      %254 = vmax.xlane.f32.xlu0 %v253
      %v255 = vpop.xlane.xlu0 %254
      %v256 = vsub.f32 %v249, %v255
      %v257 = vmul.f32 %v256, 1.442695
      %v258 = vpow.pop %v257
      %v259 = vsel %vm252, %v258, 0.0
      %260 = vadd.xlane.f32.xlu0 %v259
      %v261 = vpop.xlane.xlu0 %260
      %v262 = vrcp.pop %v261
      %v263 = vlaneseq
      %v264 = vand.u32 %v263, 127
      %v265 = vsel %vm252, %v258, -inf
      %266 = vmax.xlane.f32.xlu0 %v265
      %v267 = vpop.xlane.xlu0 %266
      %vm268 = vcmp.eq.f32.partialorder %v258, %v267
      %v269 = vsel %vm268, %v264, 8
      %v270 = vsel %vm252, %v269, 2147483647
      %v271 = vand.u32 %v270, 65535
      %v272 = vshra.s32 %v270, 16
      %v273 = vcvt.s32.f32 %v271
      %v274 = vcvt.s32.f32 %v272
      %275 = vmin.xlane.f32.xlu0 %v274
      %v276 = vpop.xlane.xlu0 %275
      %vm277 = vcmp.eq.f32.partialorder %v274, %v276
      %v278 = vsel %vm277, %v273, inf
      %279 = vmin.xlane.f32.xlu0 %v278
      %v280 = vpop.xlane.xlu0 %279
      %v281 = vcvt.f32.s32 %v280
      %v282 = vcvt.f32.s32 %v276
      %v283 = vshll.u32 %v282, 16
      %v284 = vadd.s32 %v283, %v281
      %v285 = vmul.f32 %v267, %v262
      %vm287 = vcmp.eq.s32.totalorder %v264, 0
      %v288 = vsel %vm287, %v285, 0
      %vm289 = vcmp.eq.s32.totalorder %v264, 2
      %v290 = vsel %vm289, %v284, %v288
      %vm291 = vcmp.eq.s32.totalorder %v264, %v284
      %v292 = vsel %vm291, -inf, %v258
      %v293 = vsel %vm252, %v292, -inf
      %294 = vmax.xlane.f32.xlu0 %v293
      %v295 = vpop.xlane.xlu0 %294
      %vm296 = vcmp.eq.f32.partialorder %v292, %v295
      %v297 = vsel %vm296, %v264, 8
      %v298 = vsel %vm252, %v297, 2147483647
      %v299 = vand.u32 %v298, 65535
      %v300 = vshra.s32 %v298, 16
      %v301 = vcvt.s32.f32 %v299
      %v302 = vcvt.s32.f32 %v300
      %303 = vmin.xlane.f32.xlu0 %v302
      %v304 = vpop.xlane.xlu0 %303
      %vm305 = vcmp.eq.f32.partialorder %v302, %v304
      %v306 = vsel %vm305, %v301, inf
      %307 = vmin.xlane.f32.xlu0 %v306
      %v308 = vpop.xlane.xlu0 %307
      %v309 = vcvt.f32.s32 %v308
      %v310 = vcvt.f32.s32 %v304
      %v311 = vshll.u32 %v310, 16
      %v312 = vadd.s32 %v311, %v309
      %v313 = vmul.f32 %v295, %v262
      %vm315 = vcmp.eq.s32.totalorder %v264, 1
      %v316 = vsel %vm315, %v313, %v290
      %vm317 = vcmp.eq.s32.totalorder %v264, 3
      %v318 = vsel %vm317, %v312, %v316
      %vm319 = vcmask 31744
      %320 = vst.msk [vmem:[%s165] sm:$0xff] %vm319, %v318
      %p321 = scmp.lt.s32.totalorder %s14, 1
      %s322 = scalar_select %p321, %s14, 1
      %s323 = smul.addr %s322, 8
      %s324 = scalar_lea.vmem %s3, %s323
      // Predicated region
      $region33: #{tpu_custom_call.1} parent=31 // pred_check
        %p325 = pneg %p100
      $region34: #{tpu_custom_call.1} parent=31 // pred_check_branch
        %327 = sbr.rel (%p325) target = $region36
      $region35: #{tpu_custom_call.1} parent=31 // pred_region
        _
      $region36: #{tpu_custom_call.1} parent=31 // pred_fallthru
        _
    $region32: #{tpu_custom_call.1} parent=5 // pred_fallthru
      _
    %p328 = scmp.le.s32.totalorder 2, %s9
    // Predicated region
    $region37: #{tpu_custom_call.1} parent=5 // pred_check
      %p329 = pneg %p328
    $region38: #{tpu_custom_call.1} parent=5 // pred_check_branch
      %331 = sbr.rel (%p329) target = $region40
    $region39: #{tpu_custom_call.1} parent=5 // pred_region
      %s332 = ssub.s32 %s9, 2
      // Predicated region
      $region41: #{tpu_custom_call.1} parent=39 // pred_check
        %p333 = pneg %p106
      $region42: #{tpu_custom_call.1} parent=39 // pred_check_branch
        %335 = sbr.rel (%p333) target = $region44
      $region43: #{tpu_custom_call.1} parent=39 // pred_region
        %p336 = scmp.lt.s32.totalorder %s15, 1
        %s337 = scalar_select %p336, %s15, 1
        %s338 = smul.addr %s337, 8
        %s339 = scalar_lea.vmem %s3, %s338
      $region44: #{tpu_custom_call.1} parent=39 // pred_fallthru
        _
    $region40: #{tpu_custom_call.1} parent=5 // pred_fallthru
      _
  $region6: #{tpu_custom_call.1} parent=0 // loop_footer
    %s13 = sadd.s32 1, %s9
  $region7: #{tpu_custom_call.1} parent=0 // loop_footer_branch
    %8 = sbr.rel target = $region3
  $region8: #{tpu_custom_call.1} parent=0 // loop_exit
    _

</llo_original>
